<compile_context>
chip_gen: v7x
topology: tpu7x:2x2x1
jax: 0.10.0
libtpu: 0.0.40
codegen_flags: <defaults>
</compile_context>

<pallas_src>
import math

import jax
import jax.numpy as jnp
from jax.experimental import pallas as pl
from jax.experimental.pallas import tpu as pltpu

INPUT_DIM = 2
HIDDEN_DIM = 10
OUTPUT_DIM = 1

# Packed-parameter column layout (shape (HIDDEN_DIM, INPUT_DIM + 3)):
#   cols [0 .. INPUT_DIM-1] : columns of W1  (W1 is (HIDDEN_DIM, INPUT_DIM))
#   col  [INPUT_DIM]        : b1
#   col  [INPUT_DIM + 1]    : W2[0, :]
#   col  [INPUT_DIM + 2]    : [b2, 0, 0, ...]
_N_PARAM_COLS = INPUT_DIM + 3


def mlp_kernel(p_ref, x_ref, o_ref):
    # p_ref: (HIDDEN_DIM, INPUT_DIM+3) packed params (constant across grid)
    # x_ref: (INPUT_DIM, B_TILE)   lane-dense batch tile
    # o_ref: (OUTPUT_DIM, B_TILE)  lane-dense output tile
    x = x_ref[...]                                     # (IN, Bt)

    # ---- Layer 1: broadcast FMAs on the VPU (K=2 is far too small for MXU).
    # h[j, b] = b1[j] + sum_i W1[j, i] * x[i, b]
    h = p_ref[:, INPUT_DIM:INPUT_DIM + 1]              # b1 column, (H, 1)
    for i in range(INPUT_DIM):                         # static unroll (2 terms)
        h = h + p_ref[:, i:i + 1] * x[i:i + 1, :]      # (H, 1)*(1, Bt) -> (H, Bt)
    h = jnp.maximum(h, 0.0)                            # ReLU, (H, Bt)

    # ---- Layer 2: 10-term VPU multiply + sublane reduce (XLU), then sigmoid.
    w2c = p_ref[:, INPUT_DIM + 1:INPUT_DIM + 2]        # (H, 1)
    b2s = p_ref[0:1, INPUT_DIM + 2:INPUT_DIM + 3]      # (1, 1)
    z = jnp.sum(w2c * h, axis=0, keepdims=True) + b2s  # (1, Bt)

    o_ref[...] = jax.nn.sigmoid(z).astype(o_ref.dtype)  # exp/recip on the EUP


def _round_up(n, m):
    return (n + m - 1) // m * m


def neural_network_forward(x, w1, b1, w2, b2, *, b_tile=8192):
    """Forward pass matching the torch module.

    x:  (B, INPUT_DIM) f32 (torch layout)
    w1: (HIDDEN_DIM, INPUT_DIM), b1: (HIDDEN_DIM,)
    w2: (OUTPUT_DIM, HIDDEN_DIM), b2: (OUTPUT_DIM,)
    Returns (B, OUTPUT_DIM) f32.
    """
    assert OUTPUT_DIM == 1, "kernel specializes the spec's output_dim == 1"
    B = x.shape[0]

    # Lane-dense layout: put batch on the lane axis, pad to a tile multiple.
    bt = min(b_tile, _round_up(B, 128))
    b_pad = _round_up(B, bt)
    x_t = jnp.zeros((INPUT_DIM, b_pad), jnp.float32).at[:, :B].set(x.T)

    # Pack all parameters (164 bytes) into one small resident VMEM block.
    b2_col = jnp.zeros((HIDDEN_DIM,), jnp.float32).at[0].set(b2[0])
    params = jnp.stack(
        [w1[:, i] for i in range(INPUT_DIM)] + [b1, w2[0, :], b2_col], axis=1
    )  # (HIDDEN_DIM, INPUT_DIM + 3)

    grid = (b_pad // bt,)
    out_t = pl.pallas_call(
        mlp_kernel,
        out_shape=jax.ShapeDtypeStruct((OUTPUT_DIM, b_pad), jnp.float32),
        grid=grid,
        in_specs=[
            # Params: full tiny block, constant index map -> fetched once.
            pl.BlockSpec((HIDDEN_DIM, _N_PARAM_COLS), lambda i: (0, 0)),
            # Batch-tiled, lane-dense input.
            pl.BlockSpec((INPUT_DIM, bt), lambda i: (0, i)),
        ],
        out_specs=pl.BlockSpec((OUTPUT_DIM, bt), lambda i: (0, i)),
        compiler_params=pltpu.CompilerParams(
            dimension_semantics=("parallel",),  # shard batch tiles across TCs
        ),
    )(params, x_t)

    return out_t[:, :B].T  # back to torch layout (B, OUTPUT_DIM)


def init_params(key):
    """Deterministic init matching the torch module's shapes / scales.

    layer_1.weight: kaiming_uniform_ (relu gain); other params: torch default
    uniform(-1/sqrt(fan_in), 1/sqrt(fan_in)). Torch layouts are kept.
    """
    k1, k2, k3, k4 = jax.random.split(key, 4)

    bound_w1 = math.sqrt(2.0) * math.sqrt(3.0 / INPUT_DIM)
    w1 = jax.random.uniform(k1, (HIDDEN_DIM, INPUT_DIM), jnp.float32,
                            minval=-bound_w1, maxval=bound_w1)
    bound_b1 = 1.0 / math.sqrt(INPUT_DIM)
    b1 = jax.random.uniform(k2, (HIDDEN_DIM,), jnp.float32,
                            minval=-bound_b1, maxval=bound_b1)

    bound_2 = 1.0 / math.sqrt(HIDDEN_DIM)
    w2 = jax.random.uniform(k3, (OUTPUT_DIM, HIDDEN_DIM), jnp.float32,
                            minval=-bound_2, maxval=bound_2)
    b2 = jax.random.uniform(k4, (OUTPUT_DIM,), jnp.float32,
                            minval=-bound_2, maxval=bound_2)
    return w1, b1, w2, b2


if __name__ == "__main__":
    key = jax.random.PRNGKey(0)
    k_x, k_p = jax.random.split(key)

    B = 512  # small, but enough to exercise a multi-step batch-tiled grid
    x = jax.random.normal(k_x, (B, INPUT_DIM), jnp.float32)
    w1, b1, w2, b2 = init_params(k_p)

    # b_tile=128 -> grid of 4 batch tiles (demonstrates pipelining); the
    # default b_tile=8192 is the production setting for large B.
    out = neural_network_forward(x, w1, b1, w2, b2, b_tile=128)
    out = jax.block_until_ready(out)

    # Reference in plain JAX (same math, torch-layout weights).
    ref = jax.nn.sigmoid(jnp.maximum(x @ w1.T + b1, 0.0) @ w2.T + b2)
    assert out.shape == (B, OUTPUT_DIM)
    assert jnp.allclose(out, ref, atol=1e-5, rtol=1e-5), "mismatch vs reference"

    print("KERNEL_OK")
</pallas_src>

<mosaic_0001>
module attributes {stable_mosaic.version = 11 : i64} {
  func.func @mlp_kernel(%arg0: i32, %arg1: memref<10x5xf32, #tpu.memory_space<vmem>>, %arg2: memref<2x128xf32, #tpu.memory_space<vmem>>, %arg3: memref<1x128xf32, #tpu.memory_space<vmem>>) attributes {dimension_semantics = [#tpu.dimension_semantics<parallel>], iteration_bounds = array<i64: 4>, scalar_prefetch = 0 : i64, scratch_operands = 0 : i64, tpu.core_type = #tpu.core_type<tc>, window_params = [{pipeline_mode = #tpu.pipeline_mode<synchronous>, transform_indices = @transform_0, window_bounds = array<i64: 10, 5>}, {transform_indices = @transform_1, window_bounds = array<i64: 2, 128>}, {transform_indices = @transform_2, window_bounds = array<i64: 1, 128>}]} {
    %c0 = arith.constant 0 : index
    %c0_0 = arith.constant 0 : index
    %0 = vector.load %arg2[%c0, %c0_0] : memref<2x128xf32, #tpu.memory_space<vmem>>, vector<2x128xf32>
    %c0_1 = arith.constant 0 : index
    %c2 = arith.constant 2 : index
    %1 = vector.load %arg1[%c0_1, %c2] : memref<10x5xf32, #tpu.memory_space<vmem>>, vector<10x1xf32>
    %c0_2 = arith.constant 0 : index
    %c0_3 = arith.constant 0 : index
    %2 = vector.load %arg1[%c0_2, %c0_3] : memref<10x5xf32, #tpu.memory_space<vmem>>, vector<10x1xf32>
    %3 = vector.extract_strided_slice %0 {offsets = [0, 0], sizes = [1, 128], strides = [1, 1]} : vector<2x128xf32> to vector<1x128xf32>
    %4 = vector.broadcast %2 : vector<10x1xf32> to vector<10x128xf32>
    %5 = vector.broadcast %3 : vector<1x128xf32> to vector<10x128xf32>
    %6 = arith.mulf %4, %5 : vector<10x128xf32>
    %7 = vector.broadcast %1 : vector<10x1xf32> to vector<10x128xf32>
    %8 = arith.addf %7, %6 : vector<10x128xf32>
    %c0_4 = arith.constant 0 : index
    %c1 = arith.constant 1 : index
    %9 = vector.load %arg1[%c0_4, %c1] : memref<10x5xf32, #tpu.memory_space<vmem>>, vector<10x1xf32>
    %10 = vector.extract_strided_slice %0 {offsets = [1, 0], sizes = [1, 128], strides = [1, 1]} : vector<2x128xf32> to vector<1x128xf32>
    %11 = vector.broadcast %9 : vector<10x1xf32> to vector<10x128xf32>
    %12 = vector.broadcast %10 : vector<1x128xf32> to vector<10x128xf32>
    %13 = arith.mulf %11, %12 : vector<10x128xf32>
    %14 = arith.addf %8, %13 : vector<10x128xf32>
    %cst = arith.constant 0.000000e+00 : f32
    %15 = vector.broadcast %cst : f32 to vector<10x128xf32>
    %16 = arith.maximumf %14, %15 : vector<10x128xf32>
    %c0_5 = arith.constant 0 : index
    %c3 = arith.constant 3 : index
    %17 = vector.load %arg1[%c0_5, %c3] : memref<10x5xf32, #tpu.memory_space<vmem>>, vector<10x1xf32>
    %c0_6 = arith.constant 0 : index
    %c4 = arith.constant 4 : index
    %18 = vector.load %arg1[%c0_6, %c4] : memref<10x5xf32, #tpu.memory_space<vmem>>, vector<1x1xf32>
    %19 = vector.broadcast %17 : vector<10x1xf32> to vector<10x128xf32>
    %20 = arith.mulf %19, %16 : vector<10x128xf32>
    %cst_7 = arith.constant dense<0.000000e+00> : vector<128xf32>
    %21 = vector.multi_reduction <add>, %20, %cst_7 [0] : vector<10x128xf32> to vector<128xf32>
    %22 = vector.shape_cast %21 : vector<128xf32> to vector<1x128xf32>
    %23 = vector.broadcast %18 : vector<1x1xf32> to vector<1x128xf32>
    %24 = arith.addf %22, %23 : vector<1x128xf32>
    %25 = arith.negf %24 : vector<1x128xf32>
    %26 = math.exp %25 : vector<1x128xf32>
    %cst_8 = arith.constant 1.000000e+00 : f32
    %27 = vector.broadcast %cst_8 : f32 to vector<1x128xf32>
    %28 = arith.addf %27, %26 : vector<1x128xf32>
    %29 = arith.divf %27, %28 : vector<1x128xf32>
    %c0_9 = arith.constant 0 : index
    %c0_10 = arith.constant 0 : index
    %30 = vector.load %arg3[%c0_9, %c0_10] : memref<1x128xf32, #tpu.memory_space<vmem>>, vector<1x128xf32>
    tpu.vector_store %arg3[%c0_9, %c0_10], %29 {strides = array<i32>} : memref<1x128xf32, #tpu.memory_space<vmem>>, vector<1x128xf32>,
    return
  }
  func.func @transform_0(%arg0: i32) -> (i32, i32) {
    %c0_i32 = arith.constant 0 : i32
    %c0_i32_0 = arith.constant 0 : i32
    %c0_i32_1 = arith.constant 0 : i32
    return %c0_i32, %c0_i32_0 : i32, i32
  }
  func.func @transform_1(%arg0: i32) -> (i32, i32) {
    %c0_i32 = arith.constant 0 : i32
    %c0_i32_0 = arith.constant 0 : i32
    return %c0_i32, %arg0 : i32, i32
  }
  func.func @transform_2(%arg0: i32) -> (i32, i32) {
    %c0_i32 = arith.constant 0 : i32
    %c0_i32_0 = arith.constant 0 : i32
    return %c0_i32, %arg0 : i32, i32
  }
}

</mosaic_0001>

<llo_original>
// kernel: tpu_custom_call.1
$region0: #{tpu_custom_call.1}
  #allocation0 [shape = 'u32[]', space=smem, size = 0x4, offset = 0x4, fixed_abs, tag = 'smem constant byte address 0x4 - core index']
  #allocation1 [shape = 'u32[144,128]{1,0:T(1,128)}', space=vmem, size = 0x12000, scoped, tag = 'internal scratch']
  %s0 = inlined_call_operand.vmem [shape: f32[10,5], index: 0, kind: input, shape index: {}]
  %s1 = inlined_call_operand.vmem [shape: f32[2,512], index: 1, kind: input, shape index: {}]
  %s2 = inlined_call_operand.hbm [shape: f32[1,512], index: 2, kind: output, shape index: {}]
  %s3 = sld [smem:[#allocation0]]
  $region41: #{tpu_custom_call.1} parent=0
    _
  %s5 = ssub.s32 1, %s3
  %s6 = scalar_select 0, %s5, %s3
  $region1: #{tpu_custom_call.1} parent=0
    #allocation2 [shape = 'u8[1024]{0}', space=vmem, size = 0x400, scoped, tag = 'output window, operand 0']
    #allocation3 [shape = 's32[2]{0}', space=sflag, size = 0x8, scoped, tag = 'scoped memory for tpu_custom_call.1']
    %7 = vsyncpa [#allocation3], 0
    %s8 = scalar_lea.sflag [#allocation3], 1
    %9 = vsyncpa %s8, 0
    loop: start=0, step=1, limit=6
    $region2: #{tpu_custom_call.1} parent=1 // loop_pre_header
      _
    $region3: #{tpu_custom_call.1} parent=1 // loop_header
      %s11 = sphi 0, %s15
      %p12 = scmp.ge.s32.totalorder %s11, 6
      %s19 = sphi 0, %s19
      %s21 = sphi 0, %s19
      %s22 = sphi 0, %s21
      %s36 = sphi 0, %s22
      %s42 = sphi 0, %s44
      %s45 = sphi 0, %s42
      %s46 = sphi 0, %s45
      %s62 = sphi 0, %s46
      %s68 = sphi 0, %s70
      %s71 = sphi 0, %s68
      %s72 = sphi 0, %s71
      %s88 = sphi 0, %s72
    $region4: #{tpu_custom_call.1} parent=1 // loop_header_branch
      %14 = sbr.rel (%p12) target = $region8
    $region5: #{tpu_custom_call.1} parent=1 // loop_body
      %s16 = ssub.s32 %s11, 1
      %s17 = ssub.s32 %s11, 2
      %s18 = sadd.s32 %s11, 1
      %s20 = sadd.s32 %s19, 1
      %p23 = scmp.eq.s32.totalorder %s11, 3
      %p24 = scmp.ne.s32.totalorder %s19, %s21
      %p25 = scmp.eq.s32.totalorder %s11, 0
      %p26 = por %p24, %p25
      %p27 = scmp.ne.s32.totalorder %s19, %s21
      %p28 = scmp.eq.s32.totalorder %s16, 3
      %p29 = por %p27, %p28
      %p30 = scmp.ne.s32.totalorder %s21, %s22
      %p31 = scmp.eq.s32.totalorder %s16, 0
      %p32 = por %p30, %p31
      %p33 = scmp.ne.s32.totalorder %s21, %s22
      %p34 = scmp.eq.s32.totalorder %s17, 3
      %p35 = por %p33, %p34
      %p37 = scmp.ne.s32.totalorder %s22, %s36
      %p38 = scmp.eq.s32.totalorder %s17, 0
      %p39 = por %p37, %p38
      %s40 = ssub.s32 %s11, %s18
      %p41 = scmp.eq.s32.totalorder %s40, 0
      %s43 = sadd.s32 %s42, 1
      %s44 = scalar_select %p41, %s42, %s43
      %p47 = pneg %p41
      %p48 = scmp.eq.s32.totalorder %s11, 3
      %p49 = por %p47, %p48
      %p50 = scmp.ne.s32.totalorder %s42, %s45
      %p51 = scmp.eq.s32.totalorder %s11, 0
      %p52 = por %p50, %p51
      %p53 = scmp.ne.s32.totalorder %s42, %s45
      %p54 = scmp.eq.s32.totalorder %s16, 3
      %p55 = por %p53, %p54
      %p56 = scmp.ne.s32.totalorder %s45, %s46
      %p57 = scmp.eq.s32.totalorder %s16, 0
      %p58 = por %p56, %p57
      %p59 = scmp.ne.s32.totalorder %s45, %s46
      %p60 = scmp.eq.s32.totalorder %s17, 3
      %p61 = por %p59, %p60
      %p63 = scmp.ne.s32.totalorder %s46, %s62
      %p64 = scmp.eq.s32.totalorder %s17, 0
      %p65 = por %p63, %p64
      %s66 = ssub.s32 %s11, %s18
      %p67 = scmp.eq.s32.totalorder %s66, 0
      %s69 = sadd.s32 %s68, 1
      %s70 = scalar_select %p67, %s68, %s69
      %p73 = pneg %p67
      %p74 = scmp.eq.s32.totalorder %s11, 3
      %p75 = por %p73, %p74
      %p76 = scmp.ne.s32.totalorder %s68, %s71
      %p77 = scmp.eq.s32.totalorder %s11, 0
      %p78 = por %p76, %p77
      %p79 = scmp.ne.s32.totalorder %s68, %s71
      %p80 = scmp.eq.s32.totalorder %s16, 3
      %p81 = por %p79, %p80
      %p82 = scmp.ne.s32.totalorder %s71, %s72
      %p83 = scmp.eq.s32.totalorder %s16, 0
      %p84 = por %p82, %p83
      %p85 = scmp.ne.s32.totalorder %s71, %s72
      %p86 = scmp.eq.s32.totalorder %s17, 3
      %p87 = por %p85, %p86
      %p89 = scmp.ne.s32.totalorder %s72, %s88
      %p90 = scmp.eq.s32.totalorder %s17, 0
      %p91 = por %p89, %p90
      %p92 = scmp.le.s32.totalorder 1, %s11
      %p93 = scmp.lt.s32.totalorder %s11, 5
      %p94 = pnand %p92, %p93
      %p95 = pneg %p94
      // Predicated region
      $region9: #{tpu_custom_call.1} parent=5 // pred_check
        _
      $region10: #{tpu_custom_call.1} parent=5 // pred_check_branch
        %97 = sbr.rel (%p94) target = $region12
      $region11: #{tpu_custom_call.1} parent=5 // pred_region
        %s98 = ssub.s32 %s11, 1
        // Predicated region
        $region13: #{tpu_custom_call.1} parent=11 // pred_check
          %p99 = pneg %p32
        $region14: #{tpu_custom_call.1} parent=11 // pred_check_branch
          %101 = sbr.rel (%p99) target = $region16
        $region15: #{tpu_custom_call.1} parent=11 // pred_region
          _
        $region16: #{tpu_custom_call.1} parent=11 // pred_fallthru
          _
      $region12: #{tpu_custom_call.1} parent=5 // pred_fallthru
        _
      %p102 = scmp.lt.s32.totalorder %s11, 4
      // Predicated region
      $region17: #{tpu_custom_call.1} parent=5 // pred_check
        %p103 = pneg %p102
      $region18: #{tpu_custom_call.1} parent=5 // pred_check_branch
        %105 = sbr.rel (%p103) target = $region20
      $region19: #{tpu_custom_call.1} parent=5 // pred_region
        // Predicated region
        $region21: #{tpu_custom_call.1} parent=19 // pred_check
          %p106 = pneg %p52
        $region22: #{tpu_custom_call.1} parent=19 // pred_check_branch
          %108 = sbr.rel (%p106) target = $region24
        $region23: #{tpu_custom_call.1} parent=19 // pred_region
          %p109 = scmp.lt.s32.totalorder %s11, 3
          %s110 = scalar_select %p109, %s11, 3
          %s111 = smul.addr %s110, 2
          %s112 = scalar_lea.vmem %s1, %s111
        $region24: #{tpu_custom_call.1} parent=19 // pred_fallthru
          _
      $region20: #{tpu_custom_call.1} parent=5 // pred_fallthru
        _
      %p113 = scmp.le.s32.totalorder 1, %s11
      %p114 = scmp.lt.s32.totalorder %s11, 5
      %p115 = pnand %p113, %p114
      %p116 = pneg %p115
      // Predicated region
      $region25: #{tpu_custom_call.1} parent=5 // pred_check
        _
      $region26: #{tpu_custom_call.1} parent=5 // pred_check_branch
        %118 = sbr.rel (%p115) target = $region28
      $region27: #{tpu_custom_call.1} parent=5 // pred_region
        %s119 = ssub.s32 %s11, 1
        %p120 = pneg %p32
        %p121 = pneg %p29
        %p122 = scmp.lt.s32.totalorder %s16, 3
        %s123 = scalar_select %p122, %s16, 3
        %s124 = smul.addr %s123, 2
        %s125 = scalar_lea.vmem %s1, %s124
        %p126 = pneg %p58
        %p127 = pneg %p55
        %p128 = pneg %p84
        %p129 = pneg %p81
        %s130 = sand.u32 %s71, 1
        %s131 = scalar_lea.sflag [#allocation3], %s130
        %s132 = sand.u32 %s71, 1
        %s133 = scalar_lea.vmem [#allocation2], %s132
        %p134 = scmp.lt.s32.totalorder %s16, 3
        %s135 = scalar_select %p134, %s16, 3
        %s136 = smul.addr %s135, 2
        %s137 = scalar_lea.vmem %s1, %s136
        %v138 = vld [vmem:[%s137] sm:$0x3]
        %v139 = vld [vmem:[%s0] sm:$0xff]
        %v140 = vld [vmem:[%s0 + $0x8] sm:$0x3]
        %142 = vset.pattern.permute.xlu0 0
        %143 = vperm.xlu0 %142, %v139
        %v144 = vpop.permute.xlu0 %143
        %147 = vset.pattern.permute.xlu0 0
        %148 = vperm.xlu0 %147, %v140
        %v149 = vpop.permute.xlu0 %148
        %v151 = vlaneseq
        %v152 = vshrl.u32 %v151, 7
        %v153 = vsub.s32 0, %v152
        %v154 = vrot.slane %v138, %v153
        %v155 = vmul.f32 %v144, %v154
        %v156 = vmul.f32 %v149, %v154
        %157 = vset.pattern.permute.xlu0 2
        %158 = vperm.xlu0 %157, %v139
        %v159 = vpop.permute.xlu0 %158
        %161 = vset.pattern.permute.xlu0 2
        %162 = vperm.xlu0 %161, %v140
        %v163 = vpop.permute.xlu0 %162
        %v165 = vadd.f32 %v159, %v155
        %v166 = vadd.f32 %v163, %v156
        %167 = vset.pattern.permute.xlu0 1
        %168 = vperm.xlu0 %167, %v139
        %v169 = vpop.permute.xlu0 %168
        %171 = vset.pattern.permute.xlu0 1
        %172 = vperm.xlu0 %171, %v140
        %v173 = vpop.permute.xlu0 %172
        %v175 = vlaneseq
        %v176 = vshrl.u32 %v175, 7
        %v177 = vsub.s32 1, %v176
        %v178 = vrot.slane %v138, %v177
        %v179 = vmul.f32 %v169, %v178
        %v180 = vmul.f32 %v173, %v178
        %v181 = vadd.f32 %v165, %v179
        %v182 = vadd.f32 %v166, %v180
        %v183 = vmax.f32 %v181, 0.0
        %v184 = vmax.f32 %v182, 0.0
        %v185 = vld [vmem:[%s0] sm:$0x1]
        %186 = vset.pattern.permute.xlu0 3
        %187 = vperm.xlu0 %186, %v139
        %v188 = vpop.permute.xlu0 %187
        %190 = vset.pattern.permute.xlu0 3
        %191 = vperm.xlu0 %190, %v140
        %v192 = vpop.permute.xlu0 %191
        %v194 = vmul.f32 %v188, %v183
        %v195 = vmul.f32 %v192, %v184
        %vm196 = vcmask 1041408
        %v197 = vsel %vm196, %v195, 0.0
        %v198 = vadd.f32 %v194, %v197
        %v199 = vrot.slane %v198, 4
        %v200 = vadd.f32 %v198, %v199
        %v201 = vrot.slane %v200, 2
        %v202 = vadd.f32 %v200, %v201
        %v203 = vrot.slane %v202, 1
        %v204 = vadd.f32 %v202, %v203
        %206 = vset.pattern.permute.xlu0 4
        %207 = vperm.xlu0 %206, %v185
        %v208 = vpop.permute.xlu0 %207
        %v210 = vadd.f32 %v204, %v208
        %v211 = vxor.u32 %v210, 2147483648
        %v212 = vmul.f32 %v211, 1.442695
        %v213 = vpow.pop %v212
        %v214 = vadd.f32 %v213, 1.0
        %v215 = vrcp.pop %v214
        %v216 = vmul.f32 1.0, %v215
        %217 = vst [vmem:[%s133] sm:$0x1] %v216
        %s218 = sand.u32 %s71, 1
        %s219 = scalar_lea.sflag [#allocation3], %s218
        %s220 = sand.u32 %s71, 1
        %s221 = scalar_lea.vmem [#allocation2], %s220
        // Predicated region
        $region29: #{tpu_custom_call.1} parent=27 // pred_check
          %p222 = pneg %p81
        $region30: #{tpu_custom_call.1} parent=27 // pred_check_branch
          %224 = sbr.rel (%p222) target = $region32
        $region31: #{tpu_custom_call.1} parent=27 // pred_region
          %s226 = ssub.s32 16, 16
          %227 = vsyncadd %s219, %s226
          %s228 = smul.addr %s16, 16
          %s229 = scalar_lea.hbm %s2, %s228
          %s231 = sshll.u32 %s221, 4
          %s232 = int_to_ptr.vmem [resolvable:$true] %s231
          %234 = dma.vmem_to_hbm [thread:$0]  %s232, 16, %s229, %s219
        $region32: #{tpu_custom_call.1} parent=27 // pred_fallthru
          _
      $region28: #{tpu_custom_call.1} parent=5 // pred_fallthru
        _
      %p235 = scmp.le.s32.totalorder 2, %s11
      // Predicated region
      $region33: #{tpu_custom_call.1} parent=5 // pred_check
        %p236 = pneg %p235
      $region34: #{tpu_custom_call.1} parent=5 // pred_check_branch
        %238 = sbr.rel (%p236) target = $region36
      $region35: #{tpu_custom_call.1} parent=5 // pred_region
        %s239 = ssub.s32 %s11, 2
        // Predicated region
        $region37: #{tpu_custom_call.1} parent=35 // pred_check
          %p240 = pneg %p87
        $region38: #{tpu_custom_call.1} parent=35 // pred_check_branch
          %242 = sbr.rel (%p240) target = $region40
        $region39: #{tpu_custom_call.1} parent=35 // pred_region
          %s243 = sand.u32 %s72, 1
          %s244 = scalar_lea.sflag [#allocation3], %s243
          %s245 = sand.u32 %s72, 1
          %s246 = scalar_lea.vmem [#allocation2], %s245
          %247 = dma.done %s244, 16
        $region40: #{tpu_custom_call.1} parent=35 // pred_fallthru
          _
      $region36: #{tpu_custom_call.1} parent=5 // pred_fallthru
        _
    $region6: #{tpu_custom_call.1} parent=1 // loop_footer
      %s15 = sadd.s32 1, %s11
    $region7: #{tpu_custom_call.1} parent=1 // loop_footer_branch
      %10 = sbr.rel target = $region3
    $region8: #{tpu_custom_call.1} parent=1 // loop_exit
      _
    %248 = vsyncpa [#allocation3], 1
    %s249 = scalar_lea.sflag [#allocation3], 1
    %250 = vsyncpa %s249, 1

</llo_original>
